<compile_context>
chip_gen: v5e
topology: v5e:2x2
jax: 0.10.0
libtpu: 0.0.40
codegen_flags: <defaults>
</compile_context>

<pallas_src>
import jax
import jax.numpy as jnp
from jax.experimental import pallas as pl
from jax.experimental.pallas import tpu as pltpu

HIDDEN = 10  # fixed by the module definition


def ae3_kernel(x_ref,
               w0_ref, b0_ref,
               w1_ref, b1_ref,
               w2_ref, b2_ref,
               w3_ref, b3_ref,
               o_ref):
    # All compute in f32 regardless of I/O dtype (v5e has no bf16 VPU/EUP).
    h = jnp.tanh(x_ref[...].astype(jnp.float32))
    h = jnp.dot(h, w0_ref[...], preferred_element_type=jnp.float32) + b0_ref[...]
    h = jnp.tanh(h)
    h = jnp.dot(h, w1_ref[...], preferred_element_type=jnp.float32) + b1_ref[...]
    h = jnp.tanh(h)
    h = jnp.dot(h, w2_ref[...], preferred_element_type=jnp.float32) + b2_ref[...]
    h = jnp.tanh(h)
    o_ref[...] = (jnp.dot(h, w3_ref[...], preferred_element_type=jnp.float32)
                  + b3_ref[...]).astype(o_ref.dtype)


def _round_up(n, m):
    return ((n + m - 1) // m) * m


def init_linear(key, in_features, out_features):
    """PyTorch nn.Linear default init: U(-1/sqrt(in), 1/sqrt(in)); W is (out, in)."""
    kw, kb = jax.random.split(key)
    bound = 1.0 / (in_features ** 0.5)
    w = jax.random.uniform(kw, (out_features, in_features), jnp.float32,
                           minval=-bound, maxval=bound)
    b = jax.random.uniform(kb, (out_features,), jnp.float32,
                           minval=-bound, maxval=bound)
    return w, b


def prepare_kernel_params(torch_params):
    """One-time glue (hoisted out of the hot path).

    Transposes each W from PyTorch (out, in) to (in, out), and if the input
    dim divides 128, builds block-diagonal packed weights so PACK samples
    share one 128-lane row:  W_packed = kron(I_PACK, W_t),  b_packed = tile(b, PACK).
    """
    in_dim = torch_params[0][0].shape[1]
    pack = 128 // in_dim if (in_dim <= 128 and 128 % in_dim == 0) else 1
    eye = jnp.eye(pack, dtype=jnp.float32)
    packed = []
    for (w, b) in torch_params:
        w_t = jnp.asarray(w, jnp.float32).T          # (in, out)
        if pack > 1:
            w_p = jnp.kron(eye, w_t)                  # block-diagonal (in*P, out*P)
            b_p = jnp.tile(jnp.asarray(b, jnp.float32), pack).reshape(1, -1)
        else:
            w_p = w_t
            b_p = jnp.asarray(b, jnp.float32).reshape(1, -1)
        packed.append((w_p, b_p))
    return {"pack": pack, "in_dim": in_dim, "params": packed}


def ae3_forward(x, prepared, *, block_rows=2048):
    """x: (B, D) float32 or bfloat16.  Returns (B, D) in x.dtype."""
    B, D = x.shape
    pack = prepared["pack"]
    params = prepared["params"]
    io_dtype = x.dtype

    # --- lane-dense packing: PACK consecutive samples per 128-lane row ------
    rem = B % pack if pack > 1 else 0
    if pack > 1:
        if rem:
            x = jnp.concatenate([x, jnp.zeros((pack - rem, D), x.dtype)], axis=0)
        Bp = x.shape[0] // pack
        xp = x.reshape(Bp, D * pack)                  # free, row-major contiguous
    else:
        Bp = B
        xp = x
    Dp = xp.shape[1]

    # --- batch tile: sublane-granule multiple, big enough to amortize the
    # per-step pipeline overhead, small enough that grid >= 2 (both v7x TCs). --
    sub = max(8, 32 // xp.dtype.itemsize)             # 8 for f32, 16 for bf16
    if Bp <= sub:
        TB = Bp                                       # full dim: always legal
    else:
        TB = min(_round_up(block_rows, sub), _round_up(pl.cdiv(Bp, 2), sub))
    grid = (pl.cdiv(Bp, TB),)                         # ragged last block is masked

    x_spec = pl.BlockSpec((TB, Dp), lambda i: (i, 0))
    o_spec = pl.BlockSpec((TB, Dp), lambda i: (i, 0))

    in_specs = [x_spec]
    flat_args = [xp]
    for w_p, b_p in params:
        in_specs.append(pl.BlockSpec(w_p.shape, lambda i: (0, 0)))  # VMEM-resident
        flat_args.append(w_p)
        in_specs.append(pl.BlockSpec(b_p.shape, lambda i: (0, 0)))
        flat_args.append(b_p)

    # --- advisory cost estimate (tiny FLOPs, bandwidth heavy) ----------------
    Hp = params[0][0].shape[1]                        # packed hidden width
    weight_bytes = sum(int(w.size) * 4 + int(b.size) * 4 for w, b in params)
    io_bytes = int(xp.size + Bp * Dp) * xp.dtype.itemsize
    cost = pl.CostEstimate(
        flops=int(2 * Bp * (Dp * Hp + Hp * Hp + Hp * Hp + Hp * Dp)),
        transcendentals=int(Bp * (Dp + 3 * Hp)),
        bytes_accessed=int(io_bytes + weight_bytes))

    out_p = pl.pallas_call(
        ae3_kernel,
        out_shape=jax.ShapeDtypeStruct((Bp, Dp), io_dtype),
        grid=grid,
        in_specs=in_specs,
        out_specs=o_spec,
        compiler_params=pltpu.CompilerParams(
            dimension_semantics=("parallel",),
            vmem_limit_bytes=32 * 1024 * 1024),
        cost_estimate=cost,
    )(*flat_args)

    # --- unpack lanes back to (B, D) -----------------------------------------
    if pack > 1:
        out = out_p.reshape(Bp * pack, D)
        if rem:
            out = out[:B]
    else:
        out = out_p
    return out


def ae3_reference(x, params_torch_layout):
    """Pure-JAX reference mirroring the PyTorch forward (W is (out, in))."""
    h = x
    for w, b in params_torch_layout:
        h = jnp.tanh(h) @ w.T + b
    return h


if __name__ == "__main__":
    D = 32  # input_shape kwarg of AE3

    key = jax.random.PRNGKey(0)
    k_x1, k_x2, k0, k1, k2, k3 = jax.random.split(key, 6)

    # Parameters in PyTorch layout (out, in), deterministic init.
    torch_params = [
        init_linear(k0, D, HIDDEN),       # eH0
        init_linear(k1, HIDDEN, HIDDEN),  # eO
        init_linear(k2, HIDDEN, HIDDEN),  # dH0
        init_linear(k3, HIDDEN, D),       # dO
    ]
    # Kernel-layout (packed / transposed) params, materialized once.
    prepared = prepare_kernel_params(torch_params)

    # 1) f32 path with a ragged batch: exercises lane-packing pad (250 % 4 != 0)
    #    and the masked ragged last grid block.
    B1 = 250
    x1 = jax.random.normal(k_x1, (B1, D), jnp.float32)
    out1 = jax.block_until_ready(ae3_forward(x1, prepared))
    ref1 = ae3_reference(x1, torch_params)
    assert out1.shape == (B1, D)
    assert jnp.allclose(out1, ref1, atol=1e-5, rtol=1e-5), "f32 mismatch vs reference"

    # 2) bf16 I/O path (halves HBM bytes on v6e/v7x); compute stays f32 in-kernel.
    B2 = 256
    x2 = jax.random.normal(k_x2, (B2, D), jnp.float32).astype(jnp.bfloat16)
    out2 = jax.block_until_ready(ae3_forward(x2, prepared))
    ref2 = ae3_reference(x2.astype(jnp.float32), torch_params)
    assert out2.shape == (B2, D) and out2.dtype == jnp.bfloat16
    assert jnp.allclose(out2.astype(jnp.float32), ref2, atol=1e-2, rtol=1e-2), \
        "bf16 mismatch vs reference"

    print("KERNEL_OK")
</pallas_src>

<mosaic_0001>
module attributes {stable_mosaic.version = 11 : i64} {
  func.func @ae3_kernel(%arg0: i32, %arg1: memref<32x128xf32, #tpu.memory_space<vmem>>, %arg2: memref<128x40xf32, #tpu.memory_space<vmem>>, %arg3: memref<1x40xf32, #tpu.memory_space<vmem>>, %arg4: memref<40x40xf32, #tpu.memory_space<vmem>>, %arg5: memref<1x40xf32, #tpu.memory_space<vmem>>, %arg6: memref<40x40xf32, #tpu.memory_space<vmem>>, %arg7: memref<1x40xf32, #tpu.memory_space<vmem>>, %arg8: memref<40x128xf32, #tpu.memory_space<vmem>>, %arg9: memref<1x128xf32, #tpu.memory_space<vmem>>, %arg10: memref<32x128xf32, #tpu.memory_space<vmem>>) attributes {dimension_semantics = [#tpu.dimension_semantics<parallel>], iteration_bounds = array<i64: 2>, scalar_prefetch = 0 : i64, scratch_operands = 0 : i64, tpu.core_type = #tpu.core_type<tc>, window_params = [{transform_indices = @transform_0, window_bounds = array<i64: 32, 128>}, {pipeline_mode = #tpu.pipeline_mode<synchronous>, transform_indices = @transform_1, window_bounds = array<i64: 128, 40>}, {pipeline_mode = #tpu.pipeline_mode<synchronous>, transform_indices = @transform_2, window_bounds = array<i64: 1, 40>}, {pipeline_mode = #tpu.pipeline_mode<synchronous>, transform_indices = @transform_3, window_bounds = array<i64: 40, 40>}, {pipeline_mode = #tpu.pipeline_mode<synchronous>, transform_indices = @transform_4, window_bounds = array<i64: 1, 40>}, {pipeline_mode = #tpu.pipeline_mode<synchronous>, transform_indices = @transform_5, window_bounds = array<i64: 40, 40>}, {pipeline_mode = #tpu.pipeline_mode<synchronous>, transform_indices = @transform_6, window_bounds = array<i64: 1, 40>}, {pipeline_mode = #tpu.pipeline_mode<synchronous>, transform_indices = @transform_7, window_bounds = array<i64: 40, 128>}, {pipeline_mode = #tpu.pipeline_mode<synchronous>, transform_indices = @transform_8, window_bounds = array<i64: 1, 128>}, {transform_indices = @transform_9, window_bounds = array<i64: 32, 128>}]} {
    %c0 = arith.constant 0 : index
    %c0_0 = arith.constant 0 : index
    %0 = vector.load %arg1[%c0, %c0_0] : memref<32x128xf32, #tpu.memory_space<vmem>>, vector<32x128xf32>
    %1 = math.tanh %0 : vector<32x128xf32>
    %c0_1 = arith.constant 0 : index
    %c0_2 = arith.constant 0 : index
    %2 = vector.load %arg2[%c0_1, %c0_2] : memref<128x40xf32, #tpu.memory_space<vmem>>, vector<128x40xf32>
    %cst = arith.constant dense<0.000000e+00> : vector<32x40xf32>
    %3 = tpu.matmul %1, %2, %cst {dimension_numbers = #tpu.dot_dimension_numbers<[1], [0], [0], [1], [0, 0, 1, 1], [], []>} : vector<32x128xf32>, vector<128x40xf32>, vector<32x40xf32> -> vector<32x40xf32>
    %c0_3 = arith.constant 0 : index
    %c0_4 = arith.constant 0 : index
    %4 = vector.load %arg3[%c0_3, %c0_4] : memref<1x40xf32, #tpu.memory_space<vmem>>, vector<1x40xf32>
    %5 = vector.broadcast %4 : vector<1x40xf32> to vector<32x40xf32>
    %6 = arith.addf %3, %5 : vector<32x40xf32>
    %7 = math.tanh %6 : vector<32x40xf32>
    %c0_5 = arith.constant 0 : index
    %c0_6 = arith.constant 0 : index
    %8 = vector.load %arg4[%c0_5, %c0_6] : memref<40x40xf32, #tpu.memory_space<vmem>>, vector<40x40xf32>
    %cst_7 = arith.constant dense<0.000000e+00> : vector<32x40xf32>
    %9 = tpu.matmul %7, %8, %cst_7 {dimension_numbers = #tpu.dot_dimension_numbers<[1], [0], [0], [1], [0, 0, 1, 1], [], []>} : vector<32x40xf32>, vector<40x40xf32>, vector<32x40xf32> -> vector<32x40xf32>
    %c0_8 = arith.constant 0 : index
    %c0_9 = arith.constant 0 : index
    %10 = vector.load %arg5[%c0_8, %c0_9] : memref<1x40xf32, #tpu.memory_space<vmem>>, vector<1x40xf32>
    %11 = vector.broadcast %10 : vector<1x40xf32> to vector<32x40xf32>
    %12 = arith.addf %9, %11 : vector<32x40xf32>
    %13 = math.tanh %12 : vector<32x40xf32>
    %c0_10 = arith.constant 0 : index
    %c0_11 = arith.constant 0 : index
    %14 = vector.load %arg6[%c0_10, %c0_11] : memref<40x40xf32, #tpu.memory_space<vmem>>, vector<40x40xf32>
    %cst_12 = arith.constant dense<0.000000e+00> : vector<32x40xf32>
    %15 = tpu.matmul %13, %14, %cst_12 {dimension_numbers = #tpu.dot_dimension_numbers<[1], [0], [0], [1], [0, 0, 1, 1], [], []>} : vector<32x40xf32>, vector<40x40xf32>, vector<32x40xf32> -> vector<32x40xf32>
    %c0_13 = arith.constant 0 : index
    %c0_14 = arith.constant 0 : index
    %16 = vector.load %arg7[%c0_13, %c0_14] : memref<1x40xf32, #tpu.memory_space<vmem>>, vector<1x40xf32>
    %17 = vector.broadcast %16 : vector<1x40xf32> to vector<32x40xf32>
    %18 = arith.addf %15, %17 : vector<32x40xf32>
    %19 = math.tanh %18 : vector<32x40xf32>
    %c0_15 = arith.constant 0 : index
    %c0_16 = arith.constant 0 : index
    %20 = vector.load %arg8[%c0_15, %c0_16] : memref<40x128xf32, #tpu.memory_space<vmem>>, vector<40x128xf32>
    %cst_17 = arith.constant dense<0.000000e+00> : vector<32x128xf32>
    %21 = tpu.matmul %19, %20, %cst_17 {dimension_numbers = #tpu.dot_dimension_numbers<[1], [0], [0], [1], [0, 0, 1, 1], [], []>} : vector<32x40xf32>, vector<40x128xf32>, vector<32x128xf32> -> vector<32x128xf32>
    %c0_18 = arith.constant 0 : index
    %c0_19 = arith.constant 0 : index
    %22 = vector.load %arg9[%c0_18, %c0_19] : memref<1x128xf32, #tpu.memory_space<vmem>>, vector<1x128xf32>
    %23 = vector.broadcast %22 : vector<1x128xf32> to vector<32x128xf32>
    %24 = arith.addf %21, %23 : vector<32x128xf32>
    %c0_20 = arith.constant 0 : index
    %c0_21 = arith.constant 0 : index
    %25 = vector.load %arg10[%c0_20, %c0_21] : memref<32x128xf32, #tpu.memory_space<vmem>>, vector<32x128xf32>
    tpu.vector_store %arg10[%c0_20, %c0_21], %24 {strides = array<i32>} : memref<32x128xf32, #tpu.memory_space<vmem>>, vector<32x128xf32>,
    return
  }
  func.func @transform_0(%arg0: i32) -> (i32, i32) {
    %c0_i32 = arith.constant 0 : i32
    %c0_i32_0 = arith.constant 0 : i32
    return %arg0, %c0_i32 : i32, i32
  }
  func.func @transform_1(%arg0: i32) -> (i32, i32) {
    %c0_i32 = arith.constant 0 : i32
    %c0_i32_0 = arith.constant 0 : i32
    %c0_i32_1 = arith.constant 0 : i32
    return %c0_i32, %c0_i32_0 : i32, i32
  }
  func.func @transform_2(%arg0: i32) -> (i32, i32) {
    %c0_i32 = arith.constant 0 : i32
    %c0_i32_0 = arith.constant 0 : i32
    %c0_i32_1 = arith.constant 0 : i32
    return %c0_i32, %c0_i32_0 : i32, i32
  }
  func.func @transform_3(%arg0: i32) -> (i32, i32) {
    %c0_i32 = arith.constant 0 : i32
    %c0_i32_0 = arith.constant 0 : i32
    %c0_i32_1 = arith.constant 0 : i32
    return %c0_i32, %c0_i32_0 : i32, i32
  }
  func.func @transform_4(%arg0: i32) -> (i32, i32) {
    %c0_i32 = arith.constant 0 : i32
    %c0_i32_0 = arith.constant 0 : i32
    %c0_i32_1 = arith.constant 0 : i32
    return %c0_i32, %c0_i32_0 : i32, i32
  }
  func.func @transform_5(%arg0: i32) -> (i32, i32) {
    %c0_i32 = arith.constant 0 : i32
    %c0_i32_0 = arith.constant 0 : i32
    %c0_i32_1 = arith.constant 0 : i32
    return %c0_i32, %c0_i32_0 : i32, i32
  }
  func.func @transform_6(%arg0: i32) -> (i32, i32) {
    %c0_i32 = arith.constant 0 : i32
    %c0_i32_0 = arith.constant 0 : i32
    %c0_i32_1 = arith.constant 0 : i32
    return %c0_i32, %c0_i32_0 : i32, i32
  }
  func.func @transform_7(%arg0: i32) -> (i32, i32) {
    %c0_i32 = arith.constant 0 : i32
    %c0_i32_0 = arith.constant 0 : i32
    %c0_i32_1 = arith.constant 0 : i32
    return %c0_i32, %c0_i32_0 : i32, i32
  }
  func.func @transform_8(%arg0: i32) -> (i32, i32) {
    %c0_i32 = arith.constant 0 : i32
    %c0_i32_0 = arith.constant 0 : i32
    %c0_i32_1 = arith.constant 0 : i32
    return %c0_i32, %c0_i32_0 : i32, i32
  }
  func.func @transform_9(%arg0: i32) -> (i32, i32) {
    %c0_i32 = arith.constant 0 : i32
    %c0_i32_0 = arith.constant 0 : i32
    return %arg0, %c0_i32 : i32, i32
  }
}

</mosaic_0001>

<llo_original>
// kernel: tpu_custom_call.1
$region0: #{tpu_custom_call.1}
  #allocation0 [shape = 'u32[]', space=smem, size = 0x4, offset = 0x4, fixed_abs, tag = 'smem constant byte address 0x4 - core index']
  #allocation1 [shape = 'u32[72,128]{1,0:T(1,128)}', space=vmem, size = 0x9000, scoped, tag = 'internal scratch']
  %s0 = inlined_call_operand.vmem [shape: f32[63,128], index: 0, kind: input, shape index: {}]
  %s1 = inlined_call_operand.vmem [shape: f32[128,40], index: 1, kind: input, shape index: {}]
  %s2 = inlined_call_operand.vmem [shape: f32[1,40], index: 2, kind: input, shape index: {}]
  %s3 = inlined_call_operand.vmem [shape: f32[40,40], index: 3, kind: input, shape index: {}]
  %s4 = inlined_call_operand.vmem [shape: f32[1,40], index: 4, kind: input, shape index: {}]
  %s5 = inlined_call_operand.vmem [shape: f32[40,40], index: 5, kind: input, shape index: {}]
  %s6 = inlined_call_operand.vmem [shape: f32[1,40], index: 6, kind: input, shape index: {}]
  %s7 = inlined_call_operand.hbm [shape: f32[40,128], index: 7, kind: input, shape index: {}]
  %s8 = inlined_call_operand.vmem [shape: f32[1,128], index: 8, kind: input, shape index: {}]
  %s9 = inlined_call_operand.hbm [shape: f32[63,128], index: 9, kind: output, shape index: {}]
  %s10 = sld [smem:[#allocation0]]
  $region73: #{tpu_custom_call.1} parent=0
    _
  %s12 = ssub.s32 1, %s10
  %s13 = scalar_select 0, %s12, %s10
  $region1: #{tpu_custom_call.1} parent=0
    #allocation2 [shape = 'u8[20480]{0}', space=vmem, size = 0x5000, scoped, tag = 'input window, operand 7, single buffered']
    #allocation3 [shape = 's32[2]{0}', space=sflag, size = 0x8, scoped, tag = 'scoped memory for tpu_custom_call.1']
    #allocation4 [shape = 's32[2]{0}', space=sflag, size = 0x8, scoped, tag = 'scoped memory for tpu_custom_call.1']
    #allocation5 [shape = 'u8[32768]{0}', space=vmem, size = 0x8000, scoped, tag = 'output window, operand 0']
    %14 = vsyncpa [#allocation3], 0
    %15 = vsyncpa [#allocation4], 0
    %s16 = scalar_lea.sflag [#allocation4], 1
    %17 = vsyncpa %s16, 0
    loop: start=0, step=1, limit=4
    $region2: #{tpu_custom_call.1} parent=1 // loop_pre_header
      _
    $region3: #{tpu_custom_call.1} parent=1 // loop_header
      %s19 = sphi 0, %s23
      %p20 = scmp.ge.s32.totalorder %s19, 4
      %s29 = sphi 0, %s31
      %s32 = sphi 0, %s29
      %s33 = sphi 0, %s32
      %s49 = sphi 0, %s33
      %s53 = sphi 0, %s53
      %s55 = sphi 0, %s53
      %s56 = sphi 0, %s55
      %s70 = sphi 0, %s56
      %s74 = sphi 0, %s74
      %s76 = sphi 0, %s74
      %s77 = sphi 0, %s76
      %s91 = sphi 0, %s77
      %s95 = sphi 0, %s95
      %s97 = sphi 0, %s95
      %s98 = sphi 0, %s97
      %s112 = sphi 0, %s98
      %s116 = sphi 0, %s116
      %s118 = sphi 0, %s116
      %s119 = sphi 0, %s118
      %s133 = sphi 0, %s119
      %s137 = sphi 0, %s137
      %s139 = sphi 0, %s137
      %s140 = sphi 0, %s139
      %s154 = sphi 0, %s140
      %s158 = sphi 0, %s158
      %s160 = sphi 0, %s158
      %s161 = sphi 0, %s160
      %s175 = sphi 0, %s161
      %s179 = sphi 0, %s179
      %s181 = sphi 0, %s179
      %s182 = sphi 0, %s181
      %s196 = sphi 0, %s182
      %s200 = sphi 0, %s200
      %s202 = sphi 0, %s200
      %s203 = sphi 0, %s202
      %s217 = sphi 0, %s203
      %s223 = sphi 0, %s225
      %s226 = sphi 0, %s223
      %s227 = sphi 0, %s226
      %s243 = sphi 0, %s227
    $region4: #{tpu_custom_call.1} parent=1 // loop_header_branch
      %22 = sbr.rel (%p20) target = $region8
    $region5: #{tpu_custom_call.1} parent=1 // loop_body
      %s24 = ssub.s32 %s19, 1
      %s25 = ssub.s32 %s19, 2
      %s26 = sadd.s32 %s19, 1
      %s27 = ssub.s32 %s19, %s26
      %p28 = scmp.eq.s32.totalorder %s27, 0
      %s30 = sadd.s32 %s29, 1
      %s31 = scalar_select %p28, %s29, %s30
      %p34 = pneg %p28
      %p35 = scmp.eq.s32.totalorder %s19, 1
      %p36 = por %p34, %p35
      %p37 = scmp.ne.s32.totalorder %s29, %s32
      %p38 = scmp.eq.s32.totalorder %s19, 0
      %p39 = por %p37, %p38
      %p40 = scmp.ne.s32.totalorder %s29, %s32
      %p41 = scmp.eq.s32.totalorder %s24, 1
      %p42 = por %p40, %p41
      %p43 = scmp.ne.s32.totalorder %s32, %s33
      %p44 = scmp.eq.s32.totalorder %s24, 0
      %p45 = por %p43, %p44
      %p46 = scmp.ne.s32.totalorder %s32, %s33
      %p47 = scmp.eq.s32.totalorder %s25, 1
      %p48 = por %p46, %p47
      %p50 = scmp.ne.s32.totalorder %s33, %s49
      %p51 = scmp.eq.s32.totalorder %s25, 0
      %p52 = por %p50, %p51
      %s54 = sadd.s32 %s53, 1
      %p57 = scmp.eq.s32.totalorder %s19, 1
      %p58 = scmp.ne.s32.totalorder %s53, %s55
      %p59 = scmp.eq.s32.totalorder %s19, 0
      %p60 = por %p58, %p59
      %p61 = scmp.ne.s32.totalorder %s53, %s55
      %p62 = scmp.eq.s32.totalorder %s24, 1
      %p63 = por %p61, %p62
      %p64 = scmp.ne.s32.totalorder %s55, %s56
      %p65 = scmp.eq.s32.totalorder %s24, 0
      %p66 = por %p64, %p65
      %p67 = scmp.ne.s32.totalorder %s55, %s56
      %p68 = scmp.eq.s32.totalorder %s25, 1
      %p69 = por %p67, %p68
      %p71 = scmp.ne.s32.totalorder %s56, %s70
      %p72 = scmp.eq.s32.totalorder %s25, 0
      %p73 = por %p71, %p72
      %s75 = sadd.s32 %s74, 1
      %p78 = scmp.eq.s32.totalorder %s19, 1
      %p79 = scmp.ne.s32.totalorder %s74, %s76
      %p80 = scmp.eq.s32.totalorder %s19, 0
      %p81 = por %p79, %p80
      %p82 = scmp.ne.s32.totalorder %s74, %s76
      %p83 = scmp.eq.s32.totalorder %s24, 1
      %p84 = por %p82, %p83
      %p85 = scmp.ne.s32.totalorder %s76, %s77
      %p86 = scmp.eq.s32.totalorder %s24, 0
      %p87 = por %p85, %p86
      %p88 = scmp.ne.s32.totalorder %s76, %s77
      %p89 = scmp.eq.s32.totalorder %s25, 1
      %p90 = por %p88, %p89
      %p92 = scmp.ne.s32.totalorder %s77, %s91
      %p93 = scmp.eq.s32.totalorder %s25, 0
      %p94 = por %p92, %p93
      %s96 = sadd.s32 %s95, 1
      %p99 = scmp.eq.s32.totalorder %s19, 1
      %p100 = scmp.ne.s32.totalorder %s95, %s97
      %p101 = scmp.eq.s32.totalorder %s19, 0
      %p102 = por %p100, %p101
      %p103 = scmp.ne.s32.totalorder %s95, %s97
      %p104 = scmp.eq.s32.totalorder %s24, 1
      %p105 = por %p103, %p104
      %p106 = scmp.ne.s32.totalorder %s97, %s98
      %p107 = scmp.eq.s32.totalorder %s24, 0
      %p108 = por %p106, %p107
      %p109 = scmp.ne.s32.totalorder %s97, %s98
      %p110 = scmp.eq.s32.totalorder %s25, 1
      %p111 = por %p109, %p110
      %p113 = scmp.ne.s32.totalorder %s98, %s112
      %p114 = scmp.eq.s32.totalorder %s25, 0
      %p115 = por %p113, %p114
      %s117 = sadd.s32 %s116, 1
      %p120 = scmp.eq.s32.totalorder %s19, 1
      %p121 = scmp.ne.s32.totalorder %s116, %s118
      %p122 = scmp.eq.s32.totalorder %s19, 0
      %p123 = por %p121, %p122
      %p124 = scmp.ne.s32.totalorder %s116, %s118
      %p125 = scmp.eq.s32.totalorder %s24, 1
      %p126 = por %p124, %p125
      %p127 = scmp.ne.s32.totalorder %s118, %s119
      %p128 = scmp.eq.s32.totalorder %s24, 0
      %p129 = por %p127, %p128
      %p130 = scmp.ne.s32.totalorder %s118, %s119
      %p131 = scmp.eq.s32.totalorder %s25, 1
      %p132 = por %p130, %p131
      %p134 = scmp.ne.s32.totalorder %s119, %s133
      %p135 = scmp.eq.s32.totalorder %s25, 0
      %p136 = por %p134, %p135
      %s138 = sadd.s32 %s137, 1
      %p141 = scmp.eq.s32.totalorder %s19, 1
      %p142 = scmp.ne.s32.totalorder %s137, %s139
      %p143 = scmp.eq.s32.totalorder %s19, 0
      %p144 = por %p142, %p143
      %p145 = scmp.ne.s32.totalorder %s137, %s139
      %p146 = scmp.eq.s32.totalorder %s24, 1
      %p147 = por %p145, %p146
      %p148 = scmp.ne.s32.totalorder %s139, %s140
      %p149 = scmp.eq.s32.totalorder %s24, 0
      %p150 = por %p148, %p149
      %p151 = scmp.ne.s32.totalorder %s139, %s140
      %p152 = scmp.eq.s32.totalorder %s25, 1
      %p153 = por %p151, %p152
      %p155 = scmp.ne.s32.totalorder %s140, %s154
      %p156 = scmp.eq.s32.totalorder %s25, 0
      %p157 = por %p155, %p156
      %s159 = sadd.s32 %s158, 1
      %p162 = scmp.eq.s32.totalorder %s19, 1
      %p163 = scmp.ne.s32.totalorder %s158, %s160
      %p164 = scmp.eq.s32.totalorder %s19, 0
      %p165 = por %p163, %p164
      %p166 = scmp.ne.s32.totalorder %s158, %s160
      %p167 = scmp.eq.s32.totalorder %s24, 1
      %p168 = por %p166, %p167
      %p169 = scmp.ne.s32.totalorder %s160, %s161
      %p170 = scmp.eq.s32.totalorder %s24, 0
      %p171 = por %p169, %p170
      %p172 = scmp.ne.s32.totalorder %s160, %s161
      %p173 = scmp.eq.s32.totalorder %s25, 1
      %p174 = por %p172, %p173
      %p176 = scmp.ne.s32.totalorder %s161, %s175
      %p177 = scmp.eq.s32.totalorder %s25, 0
      %p178 = por %p176, %p177
      %s180 = sadd.s32 %s179, 1
      %p183 = scmp.eq.s32.totalorder %s19, 1
      %p184 = scmp.ne.s32.totalorder %s179, %s181
      %p185 = scmp.eq.s32.totalorder %s19, 0
      %p186 = por %p184, %p185
      %p187 = scmp.ne.s32.totalorder %s179, %s181
      %p188 = scmp.eq.s32.totalorder %s24, 1
      %p189 = por %p187, %p188
      %p190 = scmp.ne.s32.totalorder %s181, %s182
      %p191 = scmp.eq.s32.totalorder %s24, 0
      %p192 = por %p190, %p191
      %p193 = scmp.ne.s32.totalorder %s181, %s182
      %p194 = scmp.eq.s32.totalorder %s25, 1
      %p195 = por %p193, %p194
      %p197 = scmp.ne.s32.totalorder %s182, %s196
      %p198 = scmp.eq.s32.totalorder %s25, 0
      %p199 = por %p197, %p198
      %s201 = sadd.s32 %s200, 1
      %p204 = scmp.eq.s32.totalorder %s19, 1
      %p205 = scmp.ne.s32.totalorder %s200, %s202
      %p206 = scmp.eq.s32.totalorder %s19, 0
      %p207 = por %p205, %p206
      %p208 = scmp.ne.s32.totalorder %s200, %s202
      %p209 = scmp.eq.s32.totalorder %s24, 1
      %p210 = por %p208, %p209
      %p211 = scmp.ne.s32.totalorder %s202, %s203
      %p212 = scmp.eq.s32.totalorder %s24, 0
      %p213 = por %p211, %p212
      %p214 = scmp.ne.s32.totalorder %s202, %s203
      %p215 = scmp.eq.s32.totalorder %s25, 1
      %p216 = por %p214, %p215
      %p218 = scmp.ne.s32.totalorder %s203, %s217
      %p219 = scmp.eq.s32.totalorder %s25, 0
      %p220 = por %p218, %p219
      %s221 = ssub.s32 %s19, %s26
      %p222 = scmp.eq.s32.totalorder %s221, 0
      %s224 = sadd.s32 %s223, 1
      %s225 = scalar_select %p222, %s223, %s224
      %p228 = pneg %p222
      %p229 = scmp.eq.s32.totalorder %s19, 1
      %p230 = por %p228, %p229
      %p231 = scmp.ne.s32.totalorder %s223, %s226
      %p232 = scmp.eq.s32.totalorder %s19, 0
      %p233 = por %p231, %p232
      %p234 = scmp.ne.s32.totalorder %s223, %s226
      %p235 = scmp.eq.s32.totalorder %s24, 1
      %p236 = por %p234, %p235
      %p237 = scmp.ne.s32.totalorder %s226, %s227
      %p238 = scmp.eq.s32.totalorder %s24, 0
      %p239 = por %p237, %p238
      %p240 = scmp.ne.s32.totalorder %s226, %s227
      %p241 = scmp.eq.s32.totalorder %s25, 1
      %p242 = por %p240, %p241
      %p244 = scmp.ne.s32.totalorder %s227, %s243
      %p245 = scmp.eq.s32.totalorder %s25, 0
      %p246 = por %p244, %p245
      %p247 = scmp.le.s32.totalorder 1, %s19
      %p248 = scmp.lt.s32.totalorder %s19, 3
      %p249 = pnand %p247, %p248
      %p250 = pneg %p249
      // Predicated region
      $region9: #{tpu_custom_call.1} parent=5 // pred_check
        _
      $region10: #{tpu_custom_call.1} parent=5 // pred_check_branch
        %252 = sbr.rel (%p249) target = $region12
      $region11: #{tpu_custom_call.1} parent=5 // pred_region
        %s253 = ssub.s32 %s19, 1
        // Predicated region
        $region13: #{tpu_custom_call.1} parent=11 // pred_check
          %p254 = pneg %p66
        $region14: #{tpu_custom_call.1} parent=11 // pred_check_branch
          %256 = sbr.rel (%p254) target = $region16
        $region15: #{tpu_custom_call.1} parent=11 // pred_region
          _
        $region16: #{tpu_custom_call.1} parent=11 // pred_fallthru
          _
        // Predicated region
        $region17: #{tpu_custom_call.1} parent=11 // pred_check
          %p257 = pneg %p87
        $region18: #{tpu_custom_call.1} parent=11 // pred_check_branch
          %259 = sbr.rel (%p257) target = $region20
        $region19: #{tpu_custom_call.1} parent=11 // pred_region
          _
        $region20: #{tpu_custom_call.1} parent=11 // pred_fallthru
          _
        // Predicated region
        $region21: #{tpu_custom_call.1} parent=11 // pred_check
          %p260 = pneg %p108
        $region22: #{tpu_custom_call.1} parent=11 // pred_check_branch
          %262 = sbr.rel (%p260) target = $region24
        $region23: #{tpu_custom_call.1} parent=11 // pred_region
          _
        $region24: #{tpu_custom_call.1} parent=11 // pred_fallthru
          _
        // Predicated region
        $region25: #{tpu_custom_call.1} parent=11 // pred_check
          %p263 = pneg %p129
        $region26: #{tpu_custom_call.1} parent=11 // pred_check_branch
          %265 = sbr.rel (%p263) target = $region28
        $region27: #{tpu_custom_call.1} parent=11 // pred_region
          _
        $region28: #{tpu_custom_call.1} parent=11 // pred_fallthru
          _
        // Predicated region
        $region29: #{tpu_custom_call.1} parent=11 // pred_check
          %p266 = pneg %p150
        $region30: #{tpu_custom_call.1} parent=11 // pred_check_branch
          %268 = sbr.rel (%p266) target = $region32
        $region31: #{tpu_custom_call.1} parent=11 // pred_region
          _
        $region32: #{tpu_custom_call.1} parent=11 // pred_fallthru
          _
        // Predicated region
        $region33: #{tpu_custom_call.1} parent=11 // pred_check
          %p269 = pneg %p171
        $region34: #{tpu_custom_call.1} parent=11 // pred_check_branch
          %271 = sbr.rel (%p269) target = $region36
        $region35: #{tpu_custom_call.1} parent=11 // pred_region
          _
        $region36: #{tpu_custom_call.1} parent=11 // pred_fallthru
          _
        // Predicated region
        $region37: #{tpu_custom_call.1} parent=11 // pred_check
          %p272 = pneg %p192
        $region38: #{tpu_custom_call.1} parent=11 // pred_check_branch
          %274 = sbr.rel (%p272) target = $region40
        $region39: #{tpu_custom_call.1} parent=11 // pred_region
          %276 = vsyncadd [#allocation3], 0
          %s277 = sshll.u32 %s7, 4
          %s278 = int_to_ptr.hbm [resolvable:$true] %s277
          %s279 = sshll.u32 [#allocation2], 4
          %s280 = int_to_ptr.vmem [resolvable:$true] %s279
          %285 = dma.hbm_to_vmem [thread:$0]  %s278, 640, %s280, [#allocation3], 128, 128, 8
        $region40: #{tpu_custom_call.1} parent=11 // pred_fallthru
          _
        // Predicated region
        $region41: #{tpu_custom_call.1} parent=11 // pred_check
          %p286 = pneg %p213
        $region42: #{tpu_custom_call.1} parent=11 // pred_check_branch
          %288 = sbr.rel (%p286) target = $region44
        $region43: #{tpu_custom_call.1} parent=11 // pred_region
          _
        $region44: #{tpu_custom_call.1} parent=11 // pred_fallthru
          _
      $region12: #{tpu_custom_call.1} parent=5 // pred_fallthru
        _
      %p289 = scmp.lt.s32.totalorder %s19, 2
      // Predicated region
      $region45: #{tpu_custom_call.1} parent=5 // pred_check
        %p290 = pneg %p289
      $region46: #{tpu_custom_call.1} parent=5 // pred_check_branch
        %292 = sbr.rel (%p290) target = $region48
      $region47: #{tpu_custom_call.1} parent=5 // pred_region
        // Predicated region
        $region49: #{tpu_custom_call.1} parent=47 // pred_check
          %p293 = pneg %p39
        $region50: #{tpu_custom_call.1} parent=47 // pred_check_branch
          %295 = sbr.rel (%p293) target = $region52
        $region51: #{tpu_custom_call.1} parent=47 // pred_region
          %s296 = smul.u32 4, %s19
          %p297 = scmp.lt.s32.totalorder %s296, 7
          %s298 = scalar_select %p297, %s296, 7
          %s299 = smul.addr %s298, 8
          %s300 = scalar_lea.vmem %s0, %s299
          %s301 = smul.u32 4, %s19
        $region52: #{tpu_custom_call.1} parent=47 // pred_fallthru
          _
      $region48: #{tpu_custom_call.1} parent=5 // pred_fallthru
        _
      %p302 = scmp.le.s32.totalorder 1, %s19
      %p303 = scmp.lt.s32.totalorder %s19, 3
      %p304 = pnand %p302, %p303
      %p305 = pneg %p304
      // Predicated region
      $region53: #{tpu_custom_call.1} parent=5 // pred_check
        _
      $region54: #{tpu_custom_call.1} parent=5 // pred_check_branch
        %307 = sbr.rel (%p304) target = $region56
      $region55: #{tpu_custom_call.1} parent=5 // pred_region
        %s308 = ssub.s32 %s19, 1
        // Predicated region
        $region57: #{tpu_custom_call.1} parent=55 // pred_check
          %p309 = pneg %p192
        $region58: #{tpu_custom_call.1} parent=55 // pred_check_branch
          %311 = sbr.rel (%p309) target = $region60
        $region59: #{tpu_custom_call.1} parent=55 // pred_region
          %313 = dma.done [#allocation3], 640
        $region60: #{tpu_custom_call.1} parent=55 // pred_fallthru
          _
        %s314 = smul.u32 4, %s24
        %p315 = scmp.lt.s32.totalorder %s314, 7
        %s316 = scalar_select %p315, %s314, 7
        %s317 = smul.addr %s316, 8
        %s318 = scalar_lea.vmem %s0, %s317
        %p319 = pneg %p45
        %p320 = pneg %p42
        %p321 = pneg %p66
        %p322 = pneg %p63
        %p323 = pneg %p87
        %p324 = pneg %p84
        %p325 = pneg %p108
        %p326 = pneg %p105
        %p327 = pneg %p129
        %p328 = pneg %p126
        %p329 = pneg %p150
        %p330 = pneg %p147
        %p331 = pneg %p171
        %p332 = pneg %p168
        %p333 = pneg %p192
        %p334 = pneg %p189
        %p335 = pneg %p213
        %p336 = pneg %p210
        %p337 = pneg %p239
        %p338 = pneg %p236
        %s339 = sand.u32 %s226, 1
        %s340 = scalar_lea.sflag [#allocation4], %s339
        %s341 = sand.u32 %s226, 1
        %s342 = smul.addr %s341, 32
        %s343 = scalar_lea.vmem [#allocation5], %s342
        %s344 = smul.u32 4, %s24
        %p345 = scmp.lt.s32.totalorder %s344, 7
        %s346 = scalar_select %p345, %s344, 7
        %s347 = smul.addr %s346, 8
        %s348 = scalar_lea.vmem %s0, %s347
        %s349 = smul.u32 4, %s24
        %s350 = smul.u32 4, %s24
        %v351 = vld [vmem:[%s348] sm:$0xff]
        %v352 = vld [vmem:[%s348 + $0x8] sm:$0xff]
        %v353 = vld [vmem:[%s348 + $0x10] sm:$0xff]
        %v354 = vld [vmem:[%s348 + $0x18] sm:$0xff]
        %v355 = vtanh.pop %v351
        %v356 = vtanh.pop %v352
        %v357 = vtanh.pop %v353
        %v358 = vtanh.pop %v354
        %v359 = vld [vmem:[%s1] sm:$0xff]
        %v360 = vld [vmem:[%s1 + $0x8] sm:$0xff]
        %v361 = vld [vmem:[%s1 + $0x10] sm:$0xff]
        %v362 = vld [vmem:[%s1 + $0x18] sm:$0xff]
        %v363 = vld [vmem:[%s1 + $0x20] sm:$0xff]
        %v364 = vld [vmem:[%s1 + $0x28] sm:$0xff]
        %v365 = vld [vmem:[%s1 + $0x30] sm:$0xff]
        %v366 = vld [vmem:[%s1 + $0x38] sm:$0xff]
        %v367 = vld [vmem:[%s1 + $0x40] sm:$0xff]
        %v368 = vld [vmem:[%s1 + $0x48] sm:$0xff]
        %v369 = vld [vmem:[%s1 + $0x50] sm:$0xff]
        %v370 = vld [vmem:[%s1 + $0x58] sm:$0xff]
        %v371 = vld [vmem:[%s1 + $0x60] sm:$0xff]
        %v372 = vld [vmem:[%s1 + $0x68] sm:$0xff]
        %v373 = vld [vmem:[%s1 + $0x70] sm:$0xff]
        %v374 = vld [vmem:[%s1 + $0x78] sm:$0xff]
        %v375 = vld [vmem:[%s2] sm:$0x1]
        %v377 = vperm.slane %v375, 0
        %379 = vmatpush.msra.mxu0 %v374
        %380 = vmatpush.msra.mxu0 %v373
        %381 = vmatpush.msra.mxu0 %v372
        %382 = vmatpush.msra.mxu0 %v371
        %383 = vmatpush.msra.mxu0 %v370
        %384 = vmatpush.msra.mxu0 %v369
        %385 = vmatpush.msra.mxu0 %v368
        %386 = vmatpush.msra.mxu0 %v367
        %387 = vmatpush.msra.mxu0 %v366
        %388 = vmatpush.msra.mxu0 %v365
        %389 = vmatpush.msra.mxu0 %v364
        %390 = vmatpush.msra.mxu0 %v363
        %391 = vmatpush.msra.mxu0 %v362
        %392 = vmatpush.msra.mxu0 %v361
        %393 = vmatpush.msra.mxu0 %v360
        %394 = vmatpush.msra.mxu0 %v359
        %395 = vmatmul.f32.gmra.mxu0 %v355
        %v396 = vpop.f32.mrf.mxu0
        %v397 = vadd.f32 %v377, %v396
        %398 = vmatmul.f32.gmra.mxu0 %v356
        %v399 = vpop.f32.mrf.mxu0
        %v400 = vadd.f32 %v377, %v399
        %401 = vmatmul.f32.gmra.mxu0 %v357
        %v402 = vpop.f32.mrf.mxu0
        %v403 = vadd.f32 %v377, %v402
        %404 = vmatmul.f32.gmra.mxu0 %v358
        %v405 = vpop.f32.mrf.mxu0
        %v406 = vadd.f32 %v377, %v405
        %407 = vdwg.mxu0
        %v408 = vtanh.pop %v397
        %v409 = vtanh.pop %v400
        %v410 = vtanh.pop %v403
        %v411 = vtanh.pop %v406
        %v412 = vld [vmem:[%s3] sm:$0xff]
        %v413 = vld [vmem:[%s3 + $0x8] sm:$0xff]
        %v414 = vld [vmem:[%s3 + $0x10] sm:$0xff]
        %v415 = vld [vmem:[%s3 + $0x18] sm:$0xff]
        %v416 = vld [vmem:[%s3 + $0x20] sm:$0xff]
        %v417 = vld [vmem:[%s4] sm:$0x1]
        %v419 = vperm.slane %v417, 0
        %vm421 = vcmask 326656
        %v423 = vsel %vm421, %v408, 0
        %v426 = vsel %vm421, %v409, 0
        %v429 = vsel %vm421, %v410, 0
        %v432 = vsel %vm421, %v411, 0
        %434 = vmatpush.msra.mxu0 0.0
        %435 = vmatpush.msra.mxu0 0.0
        %436 = vmatpush.msra.mxu0 0.0
        %437 = vmatpush.msra.mxu0 0.0
        %438 = vmatpush.msra.mxu0 0.0
        %439 = vmatpush.msra.mxu0 0.0
        %440 = vmatpush.msra.mxu0 0.0
        %441 = vmatpush.msra.mxu0 0.0
        %442 = vmatpush.msra.mxu0 0.0
        %443 = vmatpush.msra.mxu0 0.0
        %444 = vmatpush.msra.mxu0 0.0
        %445 = vmatpush.msra.mxu0 %v416
        %446 = vmatpush.msra.mxu0 %v415
        %447 = vmatpush.msra.mxu0 %v414
        %448 = vmatpush.msra.mxu0 %v413
        %449 = vmatpush.msra.mxu0 %v412
        %450 = vmatmul.f32.gmra.mxu0 %v423
        %v451 = vpop.f32.mrf.mxu0
        %v452 = vadd.f32 %v419, %v451
        %453 = vmatmul.f32.gmra.mxu0 %v426
        %v454 = vpop.f32.mrf.mxu0
        %v455 = vadd.f32 %v419, %v454
        %456 = vmatmul.f32.gmra.mxu0 %v429
        %v457 = vpop.f32.mrf.mxu0
        %v458 = vadd.f32 %v419, %v457
        %459 = vmatmul.f32.gmra.mxu0 %v432
        %v460 = vpop.f32.mrf.mxu0
        %v461 = vadd.f32 %v419, %v460
        %462 = vdwg.mxu0
        %v463 = vtanh.pop %v452
        %v464 = vtanh.pop %v455
        %v465 = vtanh.pop %v458
        %v466 = vtanh.pop %v461
        %v467 = vld [vmem:[%s5] sm:$0xff]
        %v468 = vld [vmem:[%s5 + $0x8] sm:$0xff]
        %v469 = vld [vmem:[%s5 + $0x10] sm:$0xff]
        %v470 = vld [vmem:[%s5 + $0x18] sm:$0xff]
        %v471 = vld [vmem:[%s5 + $0x20] sm:$0xff]
        %v472 = vld [vmem:[%s6] sm:$0x1]
        %v474 = vperm.slane %v472, 0
        %v477 = vsel %vm421, %v463, 0
        %v480 = vsel %vm421, %v464, 0
        %v483 = vsel %vm421, %v465, 0
        %v486 = vsel %vm421, %v466, 0
        %488 = vmatpush.msra.mxu0 0.0
        %489 = vmatpush.msra.mxu0 0.0
        %490 = vmatpush.msra.mxu0 0.0
        %491 = vmatpush.msra.mxu0 0.0
        %492 = vmatpush.msra.mxu0 0.0
        %493 = vmatpush.msra.mxu0 0.0
        %494 = vmatpush.msra.mxu0 0.0
        %495 = vmatpush.msra.mxu0 0.0
        %496 = vmatpush.msra.mxu0 0.0
        %497 = vmatpush.msra.mxu0 0.0
        %498 = vmatpush.msra.mxu0 0.0
        %499 = vmatpush.msra.mxu0 %v471
        %500 = vmatpush.msra.mxu0 %v470
        %501 = vmatpush.msra.mxu0 %v469
        %502 = vmatpush.msra.mxu0 %v468
        %503 = vmatpush.msra.mxu0 %v467
        %504 = vmatmul.f32.gmra.mxu0 %v477
        %v505 = vpop.f32.mrf.mxu0
        %v506 = vadd.f32 %v474, %v505
        %507 = vmatmul.f32.gmra.mxu0 %v480
        %v508 = vpop.f32.mrf.mxu0
        %v509 = vadd.f32 %v474, %v508
        %510 = vmatmul.f32.gmra.mxu0 %v483
        %v511 = vpop.f32.mrf.mxu0
        %v512 = vadd.f32 %v474, %v511
        %513 = vmatmul.f32.gmra.mxu0 %v486
        %v514 = vpop.f32.mrf.mxu0
        %v515 = vadd.f32 %v474, %v514
        %516 = vdwg.mxu0
        %v517 = vtanh.pop %v506
        %v518 = vtanh.pop %v509
        %v519 = vtanh.pop %v512
        %v520 = vtanh.pop %v515
        %v521 = vld [vmem:[#allocation2] sm:$0xff]
        %v522 = vld [vmem:[#allocation2 + $0x8] sm:$0xff]
        %v523 = vld [vmem:[#allocation2 + $0x10] sm:$0xff]
        %v524 = vld [vmem:[#allocation2 + $0x18] sm:$0xff]
        %v525 = vld [vmem:[#allocation2 + $0x20] sm:$0xff]
        %v526 = vld [vmem:[%s8] sm:$0x1]
        %v528 = vperm.slane %v526, 0
        %v531 = vsel %vm421, %v517, 0
        %v534 = vsel %vm421, %v518, 0
        %v537 = vsel %vm421, %v519, 0
        %v540 = vsel %vm421, %v520, 0
        %542 = vmatpush.msra.mxu0 0.0
        %543 = vmatpush.msra.mxu0 0.0
        %544 = vmatpush.msra.mxu0 0.0
        %545 = vmatpush.msra.mxu0 0.0
        %546 = vmatpush.msra.mxu0 0.0
        %547 = vmatpush.msra.mxu0 0.0
        %548 = vmatpush.msra.mxu0 0.0
        %549 = vmatpush.msra.mxu0 0.0
        %550 = vmatpush.msra.mxu0 0.0
        %551 = vmatpush.msra.mxu0 0.0
        %552 = vmatpush.msra.mxu0 0.0
        %553 = vmatpush.msra.mxu0 %v525
        %554 = vmatpush.msra.mxu0 %v524
        %555 = vmatpush.msra.mxu0 %v523
        %556 = vmatpush.msra.mxu0 %v522
        %557 = vmatpush.msra.mxu0 %v521
        %558 = vmatmul.f32.gmra.mxu0 %v531
        %v559 = vpop.f32.mrf.mxu0
        %v560 = vadd.f32 %v528, %v559
        %561 = vmatmul.f32.gmra.mxu0 %v534
        %v562 = vpop.f32.mrf.mxu0
        %v563 = vadd.f32 %v528, %v562
        %564 = vmatmul.f32.gmra.mxu0 %v537
        %v565 = vpop.f32.mrf.mxu0
        %v566 = vadd.f32 %v528, %v565
        %567 = vmatmul.f32.gmra.mxu0 %v540
        %v568 = vpop.f32.mrf.mxu0
        %v569 = vadd.f32 %v528, %v568
        %570 = vdwg.mxu0
        %571 = vst [vmem:[%s343] sm:$0xff] %v560
        %572 = vst [vmem:[%s343 + $0x8] sm:$0xff] %v563
        %573 = vst [vmem:[%s343 + $0x10] sm:$0xff] %v566
        %574 = vst [vmem:[%s343 + $0x18] sm:$0xff] %v569
        %s575 = sand.u32 %s226, 1
        %s576 = scalar_lea.sflag [#allocation4], %s575
        %s577 = sand.u32 %s226, 1
        %s578 = smul.addr %s577, 32
        %s579 = scalar_lea.vmem [#allocation5], %s578
        // Predicated region
        $region61: #{tpu_custom_call.1} parent=55 // pred_check
          %p580 = pneg %p236
        $region62: #{tpu_custom_call.1} parent=55 // pred_check_branch
          %582 = sbr.rel (%p580) target = $region64
        $region63: #{tpu_custom_call.1} parent=55 // pred_region
          %s583 = smul.u32 4, %s24
          %585 = vsyncadd %s576, 0
          %s586 = smul.addr %s583, 8
          %s587 = scalar_lea.hbm %s9, %s586
          %s588 = sshll.u32 %s579, 4
          %s589 = int_to_ptr.vmem [resolvable:$true] %s588
          %s590 = sshll.u32 %s587, 4
          %s591 = int_to_ptr.hbm [resolvable:$true] %s590
          %596 = dma.vmem_to_hbm [thread:$0]  %s589, 512, %s591, %s576, 128, 128, 8
        $region64: #{tpu_custom_call.1} parent=55 // pred_fallthru
          _
      $region56: #{tpu_custom_call.1} parent=5 // pred_fallthru
        _
      %p597 = scmp.le.s32.totalorder 2, %s19
      // Predicated region
      $region65: #{tpu_custom_call.1} parent=5 // pred_check
        %p598 = pneg %p597
      $region66: #{tpu_custom_call.1} parent=5 // pred_check_branch
        %600 = sbr.rel (%p598) target = $region68
      $region67: #{tpu_custom_call.1} parent=5 // pred_region
        %s601 = ssub.s32 %s19, 2
        // Predicated region
        $region69: #{tpu_custom_call.1} parent=67 // pred_check
          %p602 = pneg %p242
        $region70: #{tpu_custom_call.1} parent=67 // pred_check_branch
          %604 = sbr.rel (%p602) target = $region72
        $region71: #{tpu_custom_call.1} parent=67 // pred_region
          %s605 = sand.u32 %s227, 1
          %s606 = scalar_lea.sflag [#allocation4], %s605
          %s607 = sand.u32 %s227, 1
          %s608 = smul.addr %s607, 32
          %s609 = scalar_lea.vmem [#allocation5], %s608
          %611 = dma.done %s606, 512
        $region72: #{tpu_custom_call.1} parent=67 // pred_fallthru
          _
      $region68: #{tpu_custom_call.1} parent=5 // pred_fallthru
        _
    $region6: #{tpu_custom_call.1} parent=1 // loop_footer
      %s23 = sadd.s32 1, %s19
    $region7: #{tpu_custom_call.1} parent=1 // loop_footer_branch
      %18 = sbr.rel target = $region3
    $region8: #{tpu_custom_call.1} parent=1 // loop_exit
      _
    %612 = vsyncpa [#allocation3], 1
    %s613 = scalar_lea.sflag [#allocation3], 1
    %614 = vsyncpa %s613, 1
    %615 = vsyncpa [#allocation4], 1
    %s616 = scalar_lea.sflag [#allocation4], 1
    %617 = vsyncpa %s616, 1

</llo_original>
